<compile_context>
chip_gen: v7x
topology: tpu7x:2x2x1
jax: 0.10.0
libtpu: 0.0.40
codegen_flags: <defaults>
</compile_context>

<pallas_src>
import functools

import jax
import jax.numpy as jnp
from jax.experimental import pallas as pl
from jax.experimental.pallas import tpu as pltpu

_NUM_CORES = 2  # leading 'parallel' axis: sharded across TCs on v7x, 2 cheap steps elsewhere


def _focal_loss_kernel(pred_ref, tgt_ref, alpha_ref, out_ref, *,
                       gamma, n_total, tile_n, blocks_per_core):
    c = pl.program_id(0)          # core / partial-sum slot
    i = pl.program_id(1)          # row-block within this core

    @pl.when(i == 0)
    def _():
        out_ref[...] = jnp.zeros_like(out_ref)

    logits = pred_ref[...].astype(jnp.float32)      # (tn, C), f32 math
    tgt = tgt_ref[...]                              # (tn, 1) int32
    alpha_t = alpha_ref[...].astype(jnp.float32)    # (tn, 1) = alpha[target]

    # Stable log-sum-exp over the class axis.
    m = jnp.max(logits, axis=1, keepdims=True)
    lse = m + jnp.log(jnp.sum(jnp.exp(logits - m), axis=1, keepdims=True))

    # logits[row, target[row]] via one-hot reduce (no full log_softmax tile).
    cls = jax.lax.broadcasted_iota(jnp.int32, logits.shape, 1)
    onehot = (cls == tgt).astype(jnp.float32)
    logit_t = jnp.sum(logits * onehot, axis=1, keepdims=True)

    logpt = logit_t - lse                           # (tn, 1)
    ce = -logpt
    pt = jnp.exp(logpt)
    d = jnp.maximum(1.0 - pt, 0.0)                  # clamp: no pow(neg, float) NaN

    g = float(gamma)
    if g == int(g) and 0 <= int(g) <= 8:
        w = jnp.ones_like(d)
        for _ in range(int(g)):                     # unrolled VPU multiplies
            w = w * d
    else:
        w = d ** g                                  # generic float exponent (EUP)

    focal = alpha_t * w * ce                        # (tn, 1)

    # Mask rows past N (covers the partial last block and any clamped
    # duplicate block from the 2-core split).
    block_id = c * blocks_per_core + i
    row = block_id * tile_n + jax.lax.broadcasted_iota(jnp.int32, focal.shape, 0)
    focal = jnp.where(row < n_total, focal, 0.0)

    out_ref[...] += jnp.sum(focal)                  # scalar broadcast into (1,1,128)


def focal_loss(pred, target, alpha, gamma=2.0, reduction='mean', tile_n=512):
    """pred: (N, C) float32/bfloat16, target: (N,) int, alpha: (C,) float."""
    if reduction not in ('mean', 'sum'):
        raise ValueError("reduction must be one of 'mean', 'sum'")
    N, C = pred.shape

    # ---- tile sizing: as many rows as fit a conservative double-buffered
    # VMEM budget (uses lane-padded footprint, safe on v7x's 64 MiB VMEM). ----
    c_pad = max(128, -(-C // 128) * 128)
    bytes_per_row = c_pad * pred.dtype.itemsize + 2 * 128 * 4   # pred + tgt + alpha (padded)
    budget = 12 * 1024 * 1024
    max_rows = max(8, budget // (2 * bytes_per_row))
    tile_n = int(min(tile_n, max_rows))
    if tile_n >= N:
        tile_n = N                                  # single block == full dim (always legal)
    else:
        tile_n = max(8, (tile_n // 8) * 8)          # sublane-aligned

    blocks_total = (N + tile_n - 1) // tile_n
    blocks_per_core = (blocks_total + _NUM_CORES - 1) // _NUM_CORES

    def _blk(c, i):
        # Clamp so the DMA never indexes past the last valid block; the kernel's
        # row mask zeroes any duplicated / padded rows.
        return jnp.minimum(c * blocks_per_core + i, blocks_total - 1)

    tgt2d = target.astype(jnp.int32).reshape(N, 1)
    alpha_rows = jnp.asarray(alpha, dtype=jnp.float32)[target].reshape(N, 1)

    kernel = functools.partial(_focal_loss_kernel,
                               gamma=float(gamma), n_total=N, tile_n=tile_n,
                               blocks_per_core=blocks_per_core)

    cost = pl.CostEstimate(
        flops=8 * N * C + 12 * N,
        transcendentals=N * (C + 2),
        bytes_accessed=N * C * pred.dtype.itemsize + 8 * N + _NUM_CORES * 128 * 4,
    )

    partials = pl.pallas_call(
        kernel,
        out_shape=jax.ShapeDtypeStruct((_NUM_CORES, 1, 128), jnp.float32),
        grid_spec=pltpu.PrefetchScalarGridSpec(
            num_scalar_prefetch=0,
            grid=(_NUM_CORES, blocks_per_core),
            in_specs=[
                pl.BlockSpec((tile_n, C), lambda c, i: (_blk(c, i), 0)),   # logits
                pl.BlockSpec((tile_n, 1), lambda c, i: (_blk(c, i), 0)),   # target
                pl.BlockSpec((tile_n, 1), lambda c, i: (_blk(c, i), 0)),   # alpha[target]
            ],
            out_specs=pl.BlockSpec((1, 1, 128), lambda c, i: (c, 0, 0)),   # per-core partial
        ),
        compiler_params=pltpu.CompilerParams(
            dimension_semantics=("parallel", "arbitrary")),
        cost_estimate=cost,
    )(pred, tgt2d, alpha_rows)

    total = jnp.sum(partials[:, 0, 0])
    if reduction == 'mean':
        total = total / jnp.float32(N)
    return total


def _focal_loss_ref(pred, target, alpha, gamma=2.0, reduction='mean'):
    """Pure-JAX reference mirroring the PyTorch module."""
    log_sm = jax.nn.log_softmax(pred.astype(jnp.float32), axis=1)
    logpt = jnp.take_along_axis(log_sm, target.reshape(-1, 1), axis=1).reshape(-1)
    ce = -logpt
    pt = jnp.exp(logpt)
    a = jnp.asarray(alpha, jnp.float32)[target]
    fl = a * (1.0 - pt) ** gamma * ce
    return jnp.mean(fl) if reduction == 'mean' else jnp.sum(fl)


if __name__ == "__main__":
    key = jax.random.PRNGKey(0)
    N, C = 64, 8
    k1, k2 = jax.random.split(key)
    pred = jax.random.normal(k1, (N, C), dtype=jnp.float32)
    target = jax.random.randint(k2, (N,), 0, C, dtype=jnp.int32)
    alpha = jnp.linspace(0.25, 1.0, C, dtype=jnp.float32)   # per-class weights

    out_mean = focal_loss(pred, target, alpha, gamma=2.0, reduction='mean')
    out_sum = focal_loss(pred, target, alpha, gamma=2.0, reduction='sum')
    jax.block_until_ready((out_mean, out_sum))

    ref_mean = _focal_loss_ref(pred, target, alpha, 2.0, 'mean')
    ref_sum = _focal_loss_ref(pred, target, alpha, 2.0, 'sum')
    assert jnp.allclose(out_mean, ref_mean, rtol=1e-5, atol=1e-5), (out_mean, ref_mean)
    assert jnp.allclose(out_sum, ref_sum, rtol=1e-5, atol=1e-5), (out_sum, ref_sum)
    print("KERNEL_OK")
</pallas_src>

<mosaic_0001>
module attributes {stable_mosaic.version = 11 : i64} {
  func.func @_focal_loss_kernel(%arg0: i32, %arg1: i32, %arg2: memref<64x8xf32, #tpu.memory_space<vmem>>, %arg3: memref<64x1xi32, #tpu.memory_space<vmem>>, %arg4: memref<64x1xf32, #tpu.memory_space<vmem>>, %arg5: memref<1x1x128xf32, #tpu.memory_space<vmem>>) attributes {dimension_semantics = [#tpu.dimension_semantics<parallel>, #tpu.dimension_semantics<arbitrary>], iteration_bounds = array<i64: 2, 1>, scalar_prefetch = 0 : i64, scratch_operands = 0 : i64, tpu.core_type = #tpu.core_type<tc>, window_params = [{transform_indices = @transform_0, window_bounds = array<i64: 64, 8>}, {transform_indices = @transform_1, window_bounds = array<i64: 64, 1>}, {transform_indices = @transform_2, window_bounds = array<i64: 64, 1>}, {transform_indices = @transform_3, window_bounds = array<i64: 1, 1, 128>}]} {
    %c0_i32 = arith.constant 0 : i32
    %0 = arith.cmpi eq, %arg1, %c0_i32 : i32
    %1 = arith.extui %0 : i1 to i32
    %c0_i32_0 = arith.constant 0 : i32
    %2 = arith.cmpi ne, %1, %c0_i32_0 : i32
    scf.if %2 {
      %cst_21 = arith.constant 0.000000e+00 : f32
      %54 = vector.broadcast %cst_21 : f32 to vector<1x1x128xf32>
      %c0_22 = arith.constant 0 : index
      %c0_23 = arith.constant 0 : index
      %c0_24 = arith.constant 0 : index
      %55 = vector.load %arg5[%c0_22, %c0_23, %c0_24] : memref<1x1x128xf32, #tpu.memory_space<vmem>>, vector<1x1x128xf32>
      tpu.vector_store %arg5[%c0_22, %c0_23, %c0_24], %54 {strides = array<i32>} : memref<1x1x128xf32, #tpu.memory_space<vmem>>, vector<1x1x128xf32>,
    } else {
    }
    %c0 = arith.constant 0 : index
    %c0_1 = arith.constant 0 : index
    %3 = vector.load %arg2[%c0, %c0_1] : memref<64x8xf32, #tpu.memory_space<vmem>>, vector<64x8xf32>
    %c0_2 = arith.constant 0 : index
    %c0_3 = arith.constant 0 : index
    %4 = vector.load %arg3[%c0_2, %c0_3] : memref<64x1xi32, #tpu.memory_space<vmem>>, vector<64x1xi32>
    %c0_4 = arith.constant 0 : index
    %c0_5 = arith.constant 0 : index
    %5 = vector.load %arg4[%c0_4, %c0_5] : memref<64x1xf32, #tpu.memory_space<vmem>>, vector<64x1xf32>
    %cst = arith.constant dense<0xFF800000> : vector<64xf32>
    %6 = vector.multi_reduction <maximumf>, %3, %cst [1] : vector<64x8xf32> to vector<64xf32>
    %7 = vector.shape_cast %6 : vector<64xf32> to vector<64x1xf32>
    %8 = vector.broadcast %7 : vector<64x1xf32> to vector<64x8xf32>
    %9 = arith.subf %3, %8 : vector<64x8xf32>
    %10 = math.exp %9 : vector<64x8xf32>
    %cst_6 = arith.constant dense<0.000000e+00> : vector<64xf32>
    %11 = vector.multi_reduction <add>, %10, %cst_6 [1] : vector<64x8xf32> to vector<64xf32>
    %12 = vector.shape_cast %11 : vector<64xf32> to vector<64x1xf32>
    %13 = math.log %12 : vector<64x1xf32>
    %14 = arith.addf %7, %13 : vector<64x1xf32>
    %15 = tpu.iota {dimensions = array<i32: 1>} : vector<64x8xi32>
    %16 = vector.broadcast %4 : vector<64x1xi32> to vector<64x8xi32>
    %17 = arith.cmpi eq, %15, %16 : vector<64x8xi32>
    %18 = arith.extui %17 : vector<64x8xi1> to vector<64x8xi32>
    %19 = arith.sitofp %18 : vector<64x8xi32> to vector<64x8xf32>
    %20 = arith.mulf %3, %19 : vector<64x8xf32>
    %cst_7 = arith.constant dense<0.000000e+00> : vector<64xf32>
    %21 = vector.multi_reduction <add>, %20, %cst_7 [1] : vector<64x8xf32> to vector<64xf32>
    %22 = vector.shape_cast %21 : vector<64xf32> to vector<64x1xf32>
    %23 = arith.subf %22, %14 : vector<64x1xf32>
    %cst_8 = arith.constant 0.000000e+00 : f32
    %24 = vector.broadcast %cst_8 : f32 to vector<64x1xf32>
    %25 = arith.subf %24, %23 : vector<64x1xf32>
    %26 = math.exp %23 : vector<64x1xf32>
    %cst_9 = arith.constant 1.000000e+00 : f32
    %27 = vector.broadcast %cst_9 : f32 to vector<64x1xf32>
    %28 = arith.subf %27, %26 : vector<64x1xf32>
    %cst_10 = arith.constant 0.000000e+00 : f32
    %29 = vector.broadcast %cst_10 : f32 to vector<64x1xf32>
    %30 = arith.maximumf %28, %29 : vector<64x1xf32>
    %cst_11 = arith.constant 1.000000e+00 : f32
    %31 = vector.broadcast %cst_11 : f32 to vector<64x1xf32>
    %32 = arith.mulf %31, %30 : vector<64x1xf32>
    %33 = arith.mulf %32, %30 : vector<64x1xf32>
    %34 = arith.mulf %5, %33 : vector<64x1xf32>
    %35 = arith.mulf %34, %25 : vector<64x1xf32>
    %c1_i32 = arith.constant 1 : i32
    %36 = arith.muli %arg0, %c1_i32 : i32
    %37 = arith.addi %36, %arg1 : i32
    %c64_i32 = arith.constant 64 : i32
    %38 = arith.muli %37, %c64_i32 : i32
    %39 = tpu.iota {dimensions = array<i32: 0>} : vector<64x1xi32>
    %40 = vector.broadcast %38 : i32 to vector<64x1xi32>
    %41 = arith.addi %40, %39 : vector<64x1xi32>
    %c64_i32_12 = arith.constant 64 : i32
    %42 = vector.broadcast %c64_i32_12 : i32 to vector<64x1xi32>
    %43 = arith.cmpi slt, %41, %42 : vector<64x1xi32>
    %cst_13 = arith.constant 0.000000e+00 : f32
    %44 = vector.broadcast %cst_13 : f32 to vector<64x1xf32>
    %45 = arith.select %43, %35, %44 : vector<64x1xi1>, vector<64x1xf32>
    %c0_14 = arith.constant 0 : index
    %c0_15 = arith.constant 0 : index
    %c0_16 = arith.constant 0 : index
    %46 = vector.load %arg5[%c0_14, %c0_15, %c0_16] : memref<1x1x128xf32, #tpu.memory_space<vmem>>, vector<1x1x128xf32>
    %47 = vector.shape_cast %45 : vector<64x1xf32> to vector<1x64x1xf32>
    %cst_17 = arith.constant dense<0.000000e+00> : vector<1xf32>
    %48 = vector.multi_reduction <add>, %47, %cst_17 [1, 2] : vector<1x64x1xf32> to vector<1xf32>
    %49 = vector.shape_cast %48 : vector<1xf32> to vector<1x1x1xf32>
    %50 = vector.extract %49[0, 0, 0] : f32 from vector<1x1x1xf32>
    %51 = vector.broadcast %50 : f32 to vector<1x1x128xf32>
    %52 = arith.addf %46, %51 : vector<1x1x128xf32>
    %c0_18 = arith.constant 0 : index
    %c0_19 = arith.constant 0 : index
    %c0_20 = arith.constant 0 : index
    %53 = vector.load %arg5[%c0_18, %c0_19, %c0_20] : memref<1x1x128xf32, #tpu.memory_space<vmem>>, vector<1x1x128xf32>
    tpu.vector_store %arg5[%c0_18, %c0_19, %c0_20], %52 {strides = array<i32>} : memref<1x1x128xf32, #tpu.memory_space<vmem>>, vector<1x1x128xf32>,
    return
  }
  func.func @transform_0(%arg0: i32, %arg1: i32) -> (i32, i32) {
    %c1_i32 = arith.constant 1 : i32
    %0 = arith.muli %arg0, %c1_i32 : i32
    %1 = arith.addi %0, %arg1 : i32
    %c0_i32 = arith.constant 0 : i32
    %2 = arith.minsi %1, %c0_i32 : i32
    %c0_i32_0 = arith.constant 0 : i32
    %c0_i32_1 = arith.constant 0 : i32
    return %2, %c0_i32_0 : i32, i32
  }
  func.func @transform_1(%arg0: i32, %arg1: i32) -> (i32, i32) {
    %c1_i32 = arith.constant 1 : i32
    %0 = arith.muli %arg0, %c1_i32 : i32
    %1 = arith.addi %0, %arg1 : i32
    %c0_i32 = arith.constant 0 : i32
    %2 = arith.minsi %1, %c0_i32 : i32
    %c0_i32_0 = arith.constant 0 : i32
    %c0_i32_1 = arith.constant 0 : i32
    return %2, %c0_i32_0 : i32, i32
  }
  func.func @transform_2(%arg0: i32, %arg1: i32) -> (i32, i32) {
    %c1_i32 = arith.constant 1 : i32
    %0 = arith.muli %arg0, %c1_i32 : i32
    %1 = arith.addi %0, %arg1 : i32
    %c0_i32 = arith.constant 0 : i32
    %2 = arith.minsi %1, %c0_i32 : i32
    %c0_i32_0 = arith.constant 0 : i32
    %c0_i32_1 = arith.constant 0 : i32
    return %2, %c0_i32_0 : i32, i32
  }
  func.func @transform_3(%arg0: i32, %arg1: i32) -> (i32, i32, i32) {
    %c0_i32 = arith.constant 0 : i32
    %c0_i32_0 = arith.constant 0 : i32
    %c0_i32_1 = arith.constant 0 : i32
    return %arg0, %c0_i32, %c0_i32_0 : i32, i32, i32
  }
}

</mosaic_0001>

<llo_original>
// kernel: tpu_custom_call.1
$region0: #{tpu_custom_call.1}
  #allocation0 [shape = 'u32[]', space=smem, size = 0x4, offset = 0x4, fixed_abs, tag = 'smem constant byte address 0x4 - core index']
  #allocation1 [shape = 'u32[144,128]{1,0:T(1,128)}', space=vmem, size = 0x12000, scoped, tag = 'internal scratch']
  %s0 = inlined_call_operand.vmem [shape: f32[64,8], index: 0, kind: input, shape index: {}]
  %s1 = inlined_call_operand.vmem [shape: s32[64,1], index: 1, kind: input, shape index: {}]
  %s2 = inlined_call_operand.vmem [shape: f32[64,1], index: 2, kind: input, shape index: {}]
  %s3 = inlined_call_operand.hbm [shape: f32[2,1,128], index: 3, kind: output, shape index: {}]
  %s4 = sld [smem:[#allocation0]]
  $region49: #{tpu_custom_call.1} parent=0
    _
  %s6 = ssub.s32 1, %s4
  %s7 = scalar_select 0, %s6, %s4
  $region1: #{tpu_custom_call.1} parent=0
    #allocation2 [shape = 'u8[1024]{0}', space=vmem, size = 0x400, scoped, tag = 'output window, operand 0']
    #allocation3 [shape = 's32[2]{0}', space=sflag, size = 0x8, scoped, tag = 'scoped memory for tpu_custom_call.1']
    %8 = vsyncpa [#allocation3], 0
    %s9 = scalar_lea.sflag [#allocation3], 1
    %10 = vsyncpa %s9, 0
    loop: start=0, step=1, limit=4
    $region2: #{tpu_custom_call.1} parent=1 // loop_pre_header
      _
    $region3: #{tpu_custom_call.1} parent=1 // loop_header
      %s12 = sphi 0, %s16
      %p13 = scmp.ge.s32.totalorder %s12, 4
      %s19 = sphi 0, %s31
      %s20 = sphi 0, %s27
      %s21 = sphi 0, %s19
      %s22 = sphi 0, %s20
      %s23 = sphi 0, %s21
      %s24 = sphi 0, %s22
      %s40 = sphi 0, %s42
      %s43 = sphi 0, %s40
      %s44 = sphi 0, %s43
      %s60 = sphi 0, %s44
      %s72 = sphi 0, %s74
      %s75 = sphi 0, %s72
      %s76 = sphi 0, %s75
      %s92 = sphi 0, %s76
      %s104 = sphi 0, %s106
      %s107 = sphi 0, %s104
      %s108 = sphi 0, %s107
      %s124 = sphi 0, %s108
      %s130 = sphi 0, %s132
      %s133 = sphi 0, %s130
      %s134 = sphi 0, %s133
      %s150 = sphi 0, %s134
    $region4: #{tpu_custom_call.1} parent=1 // loop_header_branch
      %15 = sbr.rel (%p13) target = $region8
    $region5: #{tpu_custom_call.1} parent=1 // loop_body
      %s17 = ssub.s32 %s12, 1
      %s18 = ssub.s32 %s12, 2
      %s25 = sadd.s32 1, %s20
      %p26 = scmp.ge.s32.totalorder %s25, 1
      %s27 = scalar_select %p26, 0, %s25
      %s28 = sadd.s32 1, %s19
      %s29 = scalar_select %p26, %s28, %s19
      %p30 = scmp.ge.s32.totalorder %s29, 2
      %s31 = scalar_select %p30, 0, %s29
      %s32 = sadd.s32 %s19, %s20
      %p33 = scmp.lt.s32.totalorder %s32, 0
      %s34 = scalar_select %p33, %s32, 0
      %s35 = sadd.s32 %s31, %s27
      %p36 = scmp.lt.s32.totalorder %s35, 0
      %s37 = scalar_select %p36, %s35, 0
      %s38 = ssub.s32 %s34, %s37
      %p39 = scmp.eq.s32.totalorder %s38, 0
      %s41 = sadd.s32 %s40, 1
      %s42 = scalar_select %p39, %s40, %s41
      %p45 = pneg %p39
      %p46 = scmp.eq.s32.totalorder %s12, 1
      %p47 = por %p45, %p46
      %p48 = scmp.ne.s32.totalorder %s40, %s43
      %p49 = scmp.eq.s32.totalorder %s12, 0
      %p50 = por %p48, %p49
      %p51 = scmp.ne.s32.totalorder %s40, %s43
      %p52 = scmp.eq.s32.totalorder %s17, 1
      %p53 = por %p51, %p52
      %p54 = scmp.ne.s32.totalorder %s43, %s44
      %p55 = scmp.eq.s32.totalorder %s17, 0
      %p56 = por %p54, %p55
      %p57 = scmp.ne.s32.totalorder %s43, %s44
      %p58 = scmp.eq.s32.totalorder %s18, 1
      %p59 = por %p57, %p58
      %p61 = scmp.ne.s32.totalorder %s44, %s60
      %p62 = scmp.eq.s32.totalorder %s18, 0
      %p63 = por %p61, %p62
      %s64 = sadd.s32 %s19, %s20
      %p65 = scmp.lt.s32.totalorder %s64, 0
      %s66 = scalar_select %p65, %s64, 0
      %s67 = sadd.s32 %s31, %s27
      %p68 = scmp.lt.s32.totalorder %s67, 0
      %s69 = scalar_select %p68, %s67, 0
      %s70 = ssub.s32 %s66, %s69
      %p71 = scmp.eq.s32.totalorder %s70, 0
      %s73 = sadd.s32 %s72, 1
      %s74 = scalar_select %p71, %s72, %s73
      %p77 = pneg %p71
      %p78 = scmp.eq.s32.totalorder %s12, 1
      %p79 = por %p77, %p78
      %p80 = scmp.ne.s32.totalorder %s72, %s75
      %p81 = scmp.eq.s32.totalorder %s12, 0
      %p82 = por %p80, %p81
      %p83 = scmp.ne.s32.totalorder %s72, %s75
      %p84 = scmp.eq.s32.totalorder %s17, 1
      %p85 = por %p83, %p84
      %p86 = scmp.ne.s32.totalorder %s75, %s76
      %p87 = scmp.eq.s32.totalorder %s17, 0
      %p88 = por %p86, %p87
      %p89 = scmp.ne.s32.totalorder %s75, %s76
      %p90 = scmp.eq.s32.totalorder %s18, 1
      %p91 = por %p89, %p90
      %p93 = scmp.ne.s32.totalorder %s76, %s92
      %p94 = scmp.eq.s32.totalorder %s18, 0
      %p95 = por %p93, %p94
      %s96 = sadd.s32 %s19, %s20
      %p97 = scmp.lt.s32.totalorder %s96, 0
      %s98 = scalar_select %p97, %s96, 0
      %s99 = sadd.s32 %s31, %s27
      %p100 = scmp.lt.s32.totalorder %s99, 0
      %s101 = scalar_select %p100, %s99, 0
      %s102 = ssub.s32 %s98, %s101
      %p103 = scmp.eq.s32.totalorder %s102, 0
      %s105 = sadd.s32 %s104, 1
      %s106 = scalar_select %p103, %s104, %s105
      %p109 = pneg %p103
      %p110 = scmp.eq.s32.totalorder %s12, 1
      %p111 = por %p109, %p110
      %p112 = scmp.ne.s32.totalorder %s104, %s107
      %p113 = scmp.eq.s32.totalorder %s12, 0
      %p114 = por %p112, %p113
      %p115 = scmp.ne.s32.totalorder %s104, %s107
      %p116 = scmp.eq.s32.totalorder %s17, 1
      %p117 = por %p115, %p116
      %p118 = scmp.ne.s32.totalorder %s107, %s108
      %p119 = scmp.eq.s32.totalorder %s17, 0
      %p120 = por %p118, %p119
      %p121 = scmp.ne.s32.totalorder %s107, %s108
      %p122 = scmp.eq.s32.totalorder %s18, 1
      %p123 = por %p121, %p122
      %p125 = scmp.ne.s32.totalorder %s108, %s124
      %p126 = scmp.eq.s32.totalorder %s18, 0
      %p127 = por %p125, %p126
      %s128 = ssub.s32 %s19, %s31
      %p129 = scmp.eq.s32.totalorder %s128, 0
      %s131 = sadd.s32 %s130, 1
      %s132 = scalar_select %p129, %s130, %s131
      %p135 = pneg %p129
      %p136 = scmp.eq.s32.totalorder %s12, 1
      %p137 = por %p135, %p136
      %p138 = scmp.ne.s32.totalorder %s130, %s133
      %p139 = scmp.eq.s32.totalorder %s12, 0
      %p140 = por %p138, %p139
      %p141 = scmp.ne.s32.totalorder %s130, %s133
      %p142 = scmp.eq.s32.totalorder %s17, 1
      %p143 = por %p141, %p142
      %p144 = scmp.ne.s32.totalorder %s133, %s134
      %p145 = scmp.eq.s32.totalorder %s17, 0
      %p146 = por %p144, %p145
      %p147 = scmp.ne.s32.totalorder %s133, %s134
      %p148 = scmp.eq.s32.totalorder %s18, 1
      %p149 = por %p147, %p148
      %p151 = scmp.ne.s32.totalorder %s134, %s150
      %p152 = scmp.eq.s32.totalorder %s18, 0
      %p153 = por %p151, %p152
      %p154 = scmp.le.s32.totalorder 1, %s12
      %p155 = scmp.lt.s32.totalorder %s12, 3
      %p156 = pnand %p154, %p155
      %p157 = pneg %p156
      // Predicated region
      $region9: #{tpu_custom_call.1} parent=5 // pred_check
        _
      $region10: #{tpu_custom_call.1} parent=5 // pred_check_branch
        %159 = sbr.rel (%p156) target = $region12
      $region11: #{tpu_custom_call.1} parent=5 // pred_region
        %s160 = ssub.s32 %s12, 1
      $region12: #{tpu_custom_call.1} parent=5 // pred_fallthru
        _
      %p161 = scmp.lt.s32.totalorder %s12, 2
      // Predicated region
      $region13: #{tpu_custom_call.1} parent=5 // pred_check
        %p162 = pneg %p161
      $region14: #{tpu_custom_call.1} parent=5 // pred_check_branch
        %164 = sbr.rel (%p162) target = $region16
      $region15: #{tpu_custom_call.1} parent=5 // pred_region
        // Predicated region
        $region17: #{tpu_custom_call.1} parent=15 // pred_check
          %p165 = pneg %p50
        $region18: #{tpu_custom_call.1} parent=15 // pred_check_branch
          %167 = sbr.rel (%p165) target = $region20
        $region19: #{tpu_custom_call.1} parent=15 // pred_region
          %s168 = sadd.s32 %s19, %s20
          %p169 = scmp.lt.s32.totalorder %s168, 0
          %s170 = scalar_select %p169, %s168, 0
          %s171 = smul.u32 8, %s170
          %p172 = scmp.lt.s32.totalorder %s171, 7
          %s173 = scalar_select %p172, %s171, 7
          %s174 = smul.addr %s173, 8
          %s175 = scalar_lea.vmem %s0, %s174
          %s176 = sadd.s32 %s19, %s20
          %p177 = scmp.lt.s32.totalorder %s176, 0
          %s178 = scalar_select %p177, %s176, 0
          %s179 = smul.u32 8, %s178
        $region20: #{tpu_custom_call.1} parent=15 // pred_fallthru
          _
        // Predicated region
        $region21: #{tpu_custom_call.1} parent=15 // pred_check
          %p180 = pneg %p82
        $region22: #{tpu_custom_call.1} parent=15 // pred_check_branch
          %182 = sbr.rel (%p180) target = $region24
        $region23: #{tpu_custom_call.1} parent=15 // pred_region
          %s183 = sadd.s32 %s19, %s20
          %p184 = scmp.lt.s32.totalorder %s183, 0
          %s185 = scalar_select %p184, %s183, 0
          %s186 = smul.u32 8, %s185
          %p187 = scmp.lt.s32.totalorder %s186, 7
          %s188 = scalar_select %p187, %s186, 7
          %s189 = smul.addr %s188, 8
          %s190 = scalar_lea.vmem %s1, %s189
          %s191 = sadd.s32 %s19, %s20
          %p192 = scmp.lt.s32.totalorder %s191, 0
          %s193 = scalar_select %p192, %s191, 0
          %s194 = smul.u32 8, %s193
        $region24: #{tpu_custom_call.1} parent=15 // pred_fallthru
          _
        // Predicated region
        $region25: #{tpu_custom_call.1} parent=15 // pred_check
          %p195 = pneg %p114
        $region26: #{tpu_custom_call.1} parent=15 // pred_check_branch
          %197 = sbr.rel (%p195) target = $region28
        $region27: #{tpu_custom_call.1} parent=15 // pred_region
          %s198 = sadd.s32 %s19, %s20
          %p199 = scmp.lt.s32.totalorder %s198, 0
          %s200 = scalar_select %p199, %s198, 0
          %s201 = smul.u32 8, %s200
          %p202 = scmp.lt.s32.totalorder %s201, 7
          %s203 = scalar_select %p202, %s201, 7
          %s204 = smul.addr %s203, 8
          %s205 = scalar_lea.vmem %s2, %s204
          %s206 = sadd.s32 %s19, %s20
          %p207 = scmp.lt.s32.totalorder %s206, 0
          %s208 = scalar_select %p207, %s206, 0
          %s209 = smul.u32 8, %s208
        $region28: #{tpu_custom_call.1} parent=15 // pred_fallthru
          _
      $region16: #{tpu_custom_call.1} parent=5 // pred_fallthru
        _
      %p210 = scmp.le.s32.totalorder 1, %s12
      %p211 = scmp.lt.s32.totalorder %s12, 3
      %p212 = pnand %p210, %p211
      %p213 = pneg %p212
      // Predicated region
      $region29: #{tpu_custom_call.1} parent=5 // pred_check
        _
      $region30: #{tpu_custom_call.1} parent=5 // pred_check_branch
        %215 = sbr.rel (%p212) target = $region32
      $region31: #{tpu_custom_call.1} parent=5 // pred_region
        %s216 = ssub.s32 %s12, 1
        %s217 = sadd.s32 %s21, %s22
        %p218 = scmp.lt.s32.totalorder %s217, 0
        %s219 = scalar_select %p218, %s217, 0
        %s220 = smul.u32 8, %s219
        %p221 = scmp.lt.s32.totalorder %s220, 7
        %s222 = scalar_select %p221, %s220, 7
        %s223 = smul.addr %s222, 8
        %s224 = scalar_lea.vmem %s0, %s223
        %p225 = pneg %p56
        %p226 = pneg %p53
        %s227 = sadd.s32 %s21, %s22
        %p228 = scmp.lt.s32.totalorder %s227, 0
        %s229 = scalar_select %p228, %s227, 0
        %s230 = smul.u32 8, %s229
        %p231 = scmp.lt.s32.totalorder %s230, 7
        %s232 = scalar_select %p231, %s230, 7
        %s233 = smul.addr %s232, 8
        %s234 = scalar_lea.vmem %s1, %s233
        %p235 = pneg %p88
        %p236 = pneg %p85
        %s237 = sadd.s32 %s21, %s22
        %p238 = scmp.lt.s32.totalorder %s237, 0
        %s239 = scalar_select %p238, %s237, 0
        %s240 = smul.u32 8, %s239
        %p241 = scmp.lt.s32.totalorder %s240, 7
        %s242 = scalar_select %p241, %s240, 7
        %s243 = smul.addr %s242, 8
        %s244 = scalar_lea.vmem %s2, %s243
        %p245 = pneg %p120
        %p246 = pneg %p117
        %p247 = pneg %p146
        %p248 = pneg %p143
        %s249 = sand.u32 %s133, 1
        %s250 = scalar_lea.sflag [#allocation3], %s249
        %s251 = sand.u32 %s133, 1
        %s252 = scalar_lea.vmem [#allocation2], %s251
        %s253 = sadd.s32 %s21, %s22
        %p254 = scmp.lt.s32.totalorder %s253, 0
        %s255 = scalar_select %p254, %s253, 0
        %s256 = smul.u32 8, %s255
        %p257 = scmp.lt.s32.totalorder %s256, 7
        %s258 = scalar_select %p257, %s256, 7
        %s259 = smul.addr %s258, 8
        %s260 = scalar_lea.vmem %s0, %s259
        %s261 = sadd.s32 %s21, %s22
        %p262 = scmp.lt.s32.totalorder %s261, 0
        %s263 = scalar_select %p262, %s261, 0
        %s264 = smul.u32 8, %s263
        %s265 = sadd.s32 %s21, %s22
        %p266 = scmp.lt.s32.totalorder %s265, 0
        %s267 = scalar_select %p266, %s265, 0
        %s268 = smul.u32 8, %s267
        %p269 = scmp.lt.s32.totalorder %s268, 7
        %s270 = scalar_select %p269, %s268, 7
        %s271 = smul.addr %s270, 8
        %s272 = scalar_lea.vmem %s1, %s271
        %s273 = sadd.s32 %s21, %s22
        %p274 = scmp.lt.s32.totalorder %s273, 0
        %s275 = scalar_select %p274, %s273, 0
        %s276 = smul.u32 8, %s275
        %s277 = sadd.s32 %s21, %s22
        %p278 = scmp.lt.s32.totalorder %s277, 0
        %s279 = scalar_select %p278, %s277, 0
        %s280 = smul.u32 8, %s279
        %p281 = scmp.lt.s32.totalorder %s280, 7
        %s282 = scalar_select %p281, %s280, 7
        %s283 = smul.addr %s282, 8
        %s284 = scalar_lea.vmem %s2, %s283
        %s285 = sadd.s32 %s21, %s22
        %p286 = scmp.lt.s32.totalorder %s285, 0
        %s287 = scalar_select %p286, %s285, 0
        %s288 = smul.u32 8, %s287
        %p289 = scmp.eq.s32.totalorder %s22, 0
        // Predicated region
        $region33: #{tpu_custom_call.1} parent=31 // pred_check
          %p290 = pneg %p289
        $region34: #{tpu_custom_call.1} parent=31 // pred_check_branch
          %292 = sbr.rel (%p290) target = $region36
        $region35: #{tpu_custom_call.1} parent=31 // pred_region
          %293 = vst [vmem:[%s252] sm:$0x1] 0.0
        $region36: #{tpu_custom_call.1} parent=31 // pred_fallthru
          _
        %v294 = vld [vmem:[%s260] sm:$0xff]
        %v295 = vld [vmem:[%s260 + $0x8] sm:$0xff]
        %v296 = vld [vmem:[%s260 + $0x10] sm:$0xff]
        %v297 = vld [vmem:[%s260 + $0x18] sm:$0xff]
        %v298 = vld [vmem:[%s260 + $0x20] sm:$0xff]
        %v299 = vld [vmem:[%s260 + $0x28] sm:$0xff]
        %v300 = vld [vmem:[%s260 + $0x30] sm:$0xff]
        %v301 = vld [vmem:[%s260 + $0x38] sm:$0xff]
        %v302 = vld [vmem:[%s272] sm:$0xff]
        %v303 = vld [vmem:[%s272 + $0x8] sm:$0xff]
        %v304 = vld [vmem:[%s272 + $0x10] sm:$0xff]
        %v305 = vld [vmem:[%s272 + $0x18] sm:$0xff]
        %v306 = vld [vmem:[%s272 + $0x20] sm:$0xff]
        %v307 = vld [vmem:[%s272 + $0x28] sm:$0xff]
        %v308 = vld [vmem:[%s272 + $0x30] sm:$0xff]
        %v309 = vld [vmem:[%s272 + $0x38] sm:$0xff]
        %v310 = vld [vmem:[%s284] sm:$0xff]
        %v311 = vld [vmem:[%s284 + $0x8] sm:$0xff]
        %v312 = vld [vmem:[%s284 + $0x10] sm:$0xff]
        %v313 = vld [vmem:[%s284 + $0x18] sm:$0xff]
        %v314 = vld [vmem:[%s284 + $0x20] sm:$0xff]
        %v315 = vld [vmem:[%s284 + $0x28] sm:$0xff]
        %v316 = vld [vmem:[%s284 + $0x30] sm:$0xff]
        %v317 = vld [vmem:[%s284 + $0x38] sm:$0xff]
        %vm318 = vcmask 64512
        %v319 = vsel %vm318, %v294, -inf
        %320 = vmax.xlane.f32.xlu0 %v319
        %v321 = vpop.xlane.xlu0 %320
        %v322 = vsel %vm318, %v295, -inf
        %323 = vmax.xlane.f32.xlu0 %v322
        %v324 = vpop.xlane.xlu0 %323
        %v325 = vsel %vm318, %v296, -inf
        %326 = vmax.xlane.f32.xlu0 %v325
        %v327 = vpop.xlane.xlu0 %326
        %v328 = vsel %vm318, %v297, -inf
        %329 = vmax.xlane.f32.xlu0 %v328
        %v330 = vpop.xlane.xlu0 %329
        %v331 = vsel %vm318, %v298, -inf
        %332 = vmax.xlane.f32.xlu0 %v331
        %v333 = vpop.xlane.xlu0 %332
        %v334 = vsel %vm318, %v299, -inf
        %335 = vmax.xlane.f32.xlu0 %v334
        %v336 = vpop.xlane.xlu0 %335
        %v337 = vsel %vm318, %v300, -inf
        %338 = vmax.xlane.f32.xlu0 %v337
        %v339 = vpop.xlane.xlu0 %338
        %v340 = vsel %vm318, %v301, -inf
        %341 = vmax.xlane.f32.xlu0 %v340
        %v342 = vpop.xlane.xlu0 %341
        %v343 = vsub.f32 %v294, %v321
        %v344 = vsub.f32 %v295, %v324
        %v345 = vsub.f32 %v296, %v327
        %v346 = vsub.f32 %v297, %v330
        %v347 = vsub.f32 %v298, %v333
        %v348 = vsub.f32 %v299, %v336
        %v349 = vsub.f32 %v300, %v339
        %v350 = vsub.f32 %v301, %v342
        %v351 = vmul.f32 %v343, 1.442695
        %v352 = vpow.pop %v351
        %v353 = vmul.f32 %v344, 1.442695
        %v354 = vpow.pop %v353
        %v355 = vmul.f32 %v345, 1.442695
        %v356 = vpow.pop %v355
        %v357 = vmul.f32 %v346, 1.442695
        %v358 = vpow.pop %v357
        %v359 = vmul.f32 %v347, 1.442695
        %v360 = vpow.pop %v359
        %v361 = vmul.f32 %v348, 1.442695
        %v362 = vpow.pop %v361
        %v363 = vmul.f32 %v349, 1.442695
        %v364 = vpow.pop %v363
        %v365 = vmul.f32 %v350, 1.442695
        %v366 = vpow.pop %v365
        %v367 = vsel %vm318, %v352, 0.0
        %368 = vadd.xlane.f32.xlu0 %v367
        %v369 = vpop.xlane.xlu0 %368
        %v370 = vsel %vm318, %v354, 0.0
        %371 = vadd.xlane.f32.xlu0 %v370
        %v372 = vpop.xlane.xlu0 %371
        %v373 = vsel %vm318, %v356, 0.0
        %374 = vadd.xlane.f32.xlu0 %v373
        %v375 = vpop.xlane.xlu0 %374
        %v376 = vsel %vm318, %v358, 0.0
        %377 = vadd.xlane.f32.xlu0 %v376
        %v378 = vpop.xlane.xlu0 %377
        %v379 = vsel %vm318, %v360, 0.0
        %380 = vadd.xlane.f32.xlu0 %v379
        %v381 = vpop.xlane.xlu0 %380
        %v382 = vsel %vm318, %v362, 0.0
        %383 = vadd.xlane.f32.xlu0 %v382
        %v384 = vpop.xlane.xlu0 %383
        %v385 = vsel %vm318, %v364, 0.0
        %386 = vadd.xlane.f32.xlu0 %v385
        %v387 = vpop.xlane.xlu0 %386
        %v388 = vsel %vm318, %v366, 0.0
        %389 = vadd.xlane.f32.xlu0 %v388
        %v390 = vpop.xlane.xlu0 %389
        %v391 = vlog2.pop %v369
        %v392 = vmul.f32 %v391, 0.6931472
        %v393 = vlog2.pop %v372
        %v394 = vmul.f32 %v393, 0.6931472
        %v395 = vlog2.pop %v375
        %v396 = vmul.f32 %v395, 0.6931472
        %v397 = vlog2.pop %v378
        %v398 = vmul.f32 %v397, 0.6931472
        %v399 = vlog2.pop %v381
        %v400 = vmul.f32 %v399, 0.6931472
        %v401 = vlog2.pop %v384
        %v402 = vmul.f32 %v401, 0.6931472
        %v403 = vlog2.pop %v387
        %v404 = vmul.f32 %v403, 0.6931472
        %v405 = vlog2.pop %v390
        %v406 = vmul.f32 %v405, 0.6931472
        %v407 = vadd.f32 %v321, %v392
        %v408 = vadd.f32 %v324, %v394
        %v409 = vadd.f32 %v327, %v396
        %v410 = vadd.f32 %v330, %v398
        %v411 = vadd.f32 %v333, %v400
        %v412 = vadd.f32 %v336, %v402
        %v413 = vadd.f32 %v339, %v404
        %v414 = vadd.f32 %v342, %v406
        %v415 = vlaneseq
        %v416 = vand.u32 %v415, 127
        %417 = vset.pattern.permute.xlu0 0
        %418 = vperm.xlu0 %417, %v302
        %v419 = vpop.permute.xlu0 %418
        %420 = vset.pattern.permute.xlu0 0
        %421 = vperm.xlu0 %420, %v303
        %v422 = vpop.permute.xlu0 %421
        %423 = vset.pattern.permute.xlu0 0
        %424 = vperm.xlu0 %423, %v304
        %v425 = vpop.permute.xlu0 %424
        %426 = vset.pattern.permute.xlu0 0
        %427 = vperm.xlu0 %426, %v305
        %v428 = vpop.permute.xlu0 %427
        %429 = vset.pattern.permute.xlu0 0
        %430 = vperm.xlu0 %429, %v306
        %v431 = vpop.permute.xlu0 %430
        %432 = vset.pattern.permute.xlu0 0
        %433 = vperm.xlu0 %432, %v307
        %v434 = vpop.permute.xlu0 %433
        %435 = vset.pattern.permute.xlu0 0
        %436 = vperm.xlu0 %435, %v308
        %v437 = vpop.permute.xlu0 %436
        %438 = vset.pattern.permute.xlu0 0
        %439 = vperm.xlu0 %438, %v309
        %v440 = vpop.permute.xlu0 %439
        %vm441 = vcmp.eq.s32.totalorder %v416, %v419
        %vm442 = vcmp.eq.s32.totalorder %v416, %v422
        %vm443 = vcmp.eq.s32.totalorder %v416, %v425
        %vm444 = vcmp.eq.s32.totalorder %v416, %v428
        %vm445 = vcmp.eq.s32.totalorder %v416, %v431
        %vm446 = vcmp.eq.s32.totalorder %v416, %v434
        %vm447 = vcmp.eq.s32.totalorder %v416, %v437
        %vm448 = vcmp.eq.s32.totalorder %v416, %v440
        %v449 = vsel %vm441, 1, 0
        %v450 = vsel %vm442, 1, 0
        %v451 = vsel %vm443, 1, 0
        %v452 = vsel %vm444, 1, 0
        %v453 = vsel %vm445, 1, 0
        %v454 = vsel %vm446, 1, 0
        %v455 = vsel %vm447, 1, 0
        %v456 = vsel %vm448, 1, 0
        %v457 = vcvt.s32.f32 %v449
        %v458 = vcvt.s32.f32 %v450
        %v459 = vcvt.s32.f32 %v451
        %v460 = vcvt.s32.f32 %v452
        %v461 = vcvt.s32.f32 %v453
        %v462 = vcvt.s32.f32 %v454
        %v463 = vcvt.s32.f32 %v455
        %v464 = vcvt.s32.f32 %v456
        %v465 = vmul.f32 %v294, %v457
        %v466 = vmul.f32 %v295, %v458
        %v467 = vmul.f32 %v296, %v459
        %v468 = vmul.f32 %v297, %v460
        %v469 = vmul.f32 %v298, %v461
        %v470 = vmul.f32 %v299, %v462
        %v471 = vmul.f32 %v300, %v463
        %v472 = vmul.f32 %v301, %v464
        %v473 = vsel %vm318, %v465, 0.0
        %474 = vadd.xlane.f32.xlu0 %v473
        %v475 = vpop.xlane.xlu0 %474
        %v476 = vsel %vm318, %v466, 0.0
        %477 = vadd.xlane.f32.xlu0 %v476
        %v478 = vpop.xlane.xlu0 %477
        %v479 = vsel %vm318, %v467, 0.0
        %480 = vadd.xlane.f32.xlu0 %v479
        %v481 = vpop.xlane.xlu0 %480
        %v482 = vsel %vm318, %v468, 0.0
        %483 = vadd.xlane.f32.xlu0 %v482
        %v484 = vpop.xlane.xlu0 %483
        %v485 = vsel %vm318, %v469, 0.0
        %486 = vadd.xlane.f32.xlu0 %v485
        %v487 = vpop.xlane.xlu0 %486
        %v488 = vsel %vm318, %v470, 0.0
        %489 = vadd.xlane.f32.xlu0 %v488
        %v490 = vpop.xlane.xlu0 %489
        %v491 = vsel %vm318, %v471, 0.0
        %492 = vadd.xlane.f32.xlu0 %v491
        %v493 = vpop.xlane.xlu0 %492
        %v494 = vsel %vm318, %v472, 0.0
        %495 = vadd.xlane.f32.xlu0 %v494
        %v496 = vpop.xlane.xlu0 %495
        %v497 = vsub.f32 %v475, %v407
        %v498 = vsub.f32 %v478, %v408
        %v499 = vsub.f32 %v481, %v409
        %v500 = vsub.f32 %v484, %v410
        %v501 = vsub.f32 %v487, %v411
        %v502 = vsub.f32 %v490, %v412
        %v503 = vsub.f32 %v493, %v413
        %v504 = vsub.f32 %v496, %v414
        %v505 = vsub.f32 0.0, %v497
        %v506 = vsub.f32 0.0, %v498
        %v507 = vsub.f32 0.0, %v499
        %v508 = vsub.f32 0.0, %v500
        %v509 = vsub.f32 0.0, %v501
        %v510 = vsub.f32 0.0, %v502
        %v511 = vsub.f32 0.0, %v503
        %v512 = vsub.f32 0.0, %v504
        %v513 = vmul.f32 %v497, 1.442695
        %v514 = vpow.pop %v513
        %v515 = vmul.f32 %v498, 1.442695
        %v516 = vpow.pop %v515
        %v517 = vmul.f32 %v499, 1.442695
        %v518 = vpow.pop %v517
        %v519 = vmul.f32 %v500, 1.442695
        %v520 = vpow.pop %v519
        %v521 = vmul.f32 %v501, 1.442695
        %v522 = vpow.pop %v521
        %v523 = vmul.f32 %v502, 1.442695
        %v524 = vpow.pop %v523
        %v525 = vmul.f32 %v503, 1.442695
        %v526 = vpow.pop %v525
        %v527 = vmul.f32 %v504, 1.442695
        %v528 = vpow.pop %v527
        %v529 = vsub.f32 1.0, %v514
        %v530 = vsub.f32 1.0, %v516
        %v531 = vsub.f32 1.0, %v518
        %v532 = vsub.f32 1.0, %v520
        %v533 = vsub.f32 1.0, %v522
        %v534 = vsub.f32 1.0, %v524
        %v535 = vsub.f32 1.0, %v526
        %v536 = vsub.f32 1.0, %v528
        %v537 = vmax.f32 %v529, 0.0
        %v538 = vmax.f32 %v530, 0.0
        %v539 = vmax.f32 %v531, 0.0
        %v540 = vmax.f32 %v532, 0.0
        %v541 = vmax.f32 %v533, 0.0
        %v542 = vmax.f32 %v534, 0.0
        %v543 = vmax.f32 %v535, 0.0
        %v544 = vmax.f32 %v536, 0.0
        %v545 = vmul.f32 %v537, %v537
        %v546 = vmul.f32 %v538, %v538
        %v547 = vmul.f32 %v539, %v539
        %v548 = vmul.f32 %v540, %v540
        %v549 = vmul.f32 %v541, %v541
        %v550 = vmul.f32 %v542, %v542
        %v551 = vmul.f32 %v543, %v543
        %v552 = vmul.f32 %v544, %v544
        %v553 = vmul.f32 %v310, %v545
        %v554 = vmul.f32 %v311, %v546
        %v555 = vmul.f32 %v312, %v547
        %v556 = vmul.f32 %v313, %v548
        %v557 = vmul.f32 %v314, %v549
        %v558 = vmul.f32 %v315, %v550
        %v559 = vmul.f32 %v316, %v551
        %v560 = vmul.f32 %v317, %v552
        %v561 = vmul.f32 %v553, %v505
        %v562 = vmul.f32 %v554, %v506
        %v563 = vmul.f32 %v555, %v507
        %v564 = vmul.f32 %v556, %v508
        %v565 = vmul.f32 %v557, %v509
        %v566 = vmul.f32 %v558, %v510
        %v567 = vmul.f32 %v559, %v511
        %v568 = vmul.f32 %v560, %v512
        %s569 = sadd.s32 %s21, %s22
        %s570 = smul.u32 %s569, 64
        %v571 = vlaneseq
        %v572 = vshrl.u32 %v571, 7
        %v573 = vadd.s32 %v572, 8
        %v574 = vadd.s32 %v572, 16
        %v575 = vadd.s32 %v572, 24
        %v576 = vadd.s32 %v572, 32
        %v577 = vadd.s32 %v572, 40
        %v578 = vadd.s32 %v572, 48
        %v579 = vadd.s32 %v572, 56
        %v580 = vstv %s570
        %v581 = vadd.s32 %v580, %v572
        %v582 = vadd.s32 %v580, %v573
        %v583 = vadd.s32 %v580, %v574
        %v584 = vadd.s32 %v580, %v575
        %v585 = vadd.s32 %v580, %v576
        %v586 = vadd.s32 %v580, %v577
        %v587 = vadd.s32 %v580, %v578
        %v588 = vadd.s32 %v580, %v579
        %vm589 = vcmp.lt.s32.totalorder %v581, 64
        %vm590 = vcmp.lt.s32.totalorder %v582, 64
        %vm591 = vcmp.lt.s32.totalorder %v583, 64
        %vm592 = vcmp.lt.s32.totalorder %v584, 64
        %vm593 = vcmp.lt.s32.totalorder %v585, 64
        %vm594 = vcmp.lt.s32.totalorder %v586, 64
        %vm595 = vcmp.lt.s32.totalorder %v587, 64
        %vm596 = vcmp.lt.s32.totalorder %v588, 64
        %v597 = vsel %vm589, %v561, 0.0
        %v598 = vsel %vm590, %v562, 0.0
        %v599 = vsel %vm591, %v563, 0.0
        %v600 = vsel %vm592, %v564, 0.0
        %v601 = vsel %vm593, %v565, 0.0
        %v602 = vsel %vm594, %v566, 0.0
        %v603 = vsel %vm595, %v567, 0.0
        %v604 = vsel %vm596, %v568, 0.0
        %v605 = vld [vmem:[%s252] sm:$0x1]
        %vm606 = vcmask 7168
        %v607 = vsel %vm606, %v597, 0.0
        %v608 = vsel %vm606, %v598, 0.0
        %v609 = vadd.f32 %v607, %v608
        %v610 = vsel %vm606, %v599, 0.0
        %v611 = vadd.f32 %v609, %v610
        %v612 = vsel %vm606, %v600, 0.0
        %v613 = vadd.f32 %v611, %v612
        %v614 = vsel %vm606, %v601, 0.0
        %v615 = vadd.f32 %v613, %v614
        %v616 = vsel %vm606, %v602, 0.0
        %v617 = vadd.f32 %v615, %v616
        %v618 = vsel %vm606, %v603, 0.0
        %v619 = vadd.f32 %v617, %v618
        %v620 = vsel %vm606, %v604, 0.0
        %v621 = vadd.f32 %v619, %v620
        %622 = vadd.xlane.f32.xlu0 %v621
        %v623 = vpop.xlane.xlu0 %622
        %v624 = vrot.slane %v623, 4
        %v625 = vadd.f32 %v623, %v624
        %v626 = vrot.slane %v625, 2
        %v627 = vadd.f32 %v625, %v626
        %v628 = vrot.slane %v627, 1
        %v629 = vadd.f32 %v627, %v628
        %s630 = vtos %v629
        %v631 = vstv %s630
        %v632 = vadd.f32 %v605, %v631
        %633 = vst [vmem:[%s252] sm:$0x1] %v632
        %s634 = sand.u32 %s133, 1
        %s635 = scalar_lea.sflag [#allocation3], %s634
        %s636 = sand.u32 %s133, 1
        %s637 = scalar_lea.vmem [#allocation2], %s636
        // Predicated region
        $region37: #{tpu_custom_call.1} parent=31 // pred_check
          %p638 = pneg %p143
        $region38: #{tpu_custom_call.1} parent=31 // pred_check_branch
          %640 = sbr.rel (%p638) target = $region40
        $region39: #{tpu_custom_call.1} parent=31 // pred_region
          %s642 = ssub.s32 16, 16
          %643 = vsyncadd %s635, %s642
          %s644 = smul.addr %s21, 16
          %s645 = scalar_lea.hbm %s3, %s644
          %s647 = sshll.u32 %s637, 4
          %s648 = int_to_ptr.vmem [resolvable:$true] %s647
          %650 = dma.vmem_to_hbm [thread:$0]  %s648, 16, %s645, %s635
        $region40: #{tpu_custom_call.1} parent=31 // pred_fallthru
          _
      $region32: #{tpu_custom_call.1} parent=5 // pred_fallthru
        _
      %p651 = scmp.le.s32.totalorder 2, %s12
      // Predicated region
      $region41: #{tpu_custom_call.1} parent=5 // pred_check
        %p652 = pneg %p651
      $region42: #{tpu_custom_call.1} parent=5 // pred_check_branch
        %654 = sbr.rel (%p652) target = $region44
      $region43: #{tpu_custom_call.1} parent=5 // pred_region
        %s655 = ssub.s32 %s12, 2
        // Predicated region
        $region45: #{tpu_custom_call.1} parent=43 // pred_check
          %p656 = pneg %p149
        $region46: #{tpu_custom_call.1} parent=43 // pred_check_branch
          %658 = sbr.rel (%p656) target = $region48
        $region47: #{tpu_custom_call.1} parent=43 // pred_region
          %s659 = sand.u32 %s134, 1
          %s660 = scalar_lea.sflag [#allocation3], %s659
          %s661 = sand.u32 %s134, 1
          %s662 = scalar_lea.vmem [#allocation2], %s661
          %663 = dma.done %s660, 16
        $region48: #{tpu_custom_call.1} parent=43 // pred_fallthru
          _
      $region44: #{tpu_custom_call.1} parent=5 // pred_fallthru
        _
    $region6: #{tpu_custom_call.1} parent=1 // loop_footer
      %s16 = sadd.s32 1, %s12
    $region7: #{tpu_custom_call.1} parent=1 // loop_footer_branch
      %11 = sbr.rel target = $region3
    $region8: #{tpu_custom_call.1} parent=1 // loop_exit
      _
    %664 = vsyncpa [#allocation3], 1
    %s665 = scalar_lea.sflag [#allocation3], 1
    %666 = vsyncpa %s665, 1

</llo_original>
